<compile_context>
chip_gen: v6e
topology: v6e:2x2x1
jax: 0.10.0
libtpu: 0.0.40
codegen_flags: <defaults>
</compile_context>

<pallas_src>
import math
import jax
import jax.numpy as jnp
from jax.experimental import pallas as pl
from jax.experimental.pallas import tpu as pltpu


NEG_SLOPE = 0.01      # F.leaky_relu default
MASK_FILL = -1e10     # reference masked_fill value
MASK_ABS = 1e10       # additive mask magnitude: 0 where adj==1, -1e10 where adj==0


def _leaky_relu(v):
    return jnp.where(v > 0, v, NEG_SLOPE * v)


def _softmax_last(v):
    m = jnp.max(v, axis=-1, keepdims=True)
    e = jnp.exp(v - m)
    # EUP approx reciprocal only here (softmax denominator) — frees the VPU divide sequence.
    return e * pl.reciprocal(jnp.sum(e, axis=-1, keepdims=True), approx=True)


def _bf16(v):
    return v.astype(jnp.bfloat16)


def hgcn_kernel(x_ref, adj_ref, wlin_t_ref, blin_ref, wbi_e_ref, wbi_n_ref, out_ref):
    # One batch element per grid step (batch dim squeezed out of every block spec).
    x16 = x_ref[...]          # (N, D) bf16 — MXU operand
    adj = adj_ref[...]        # (E, N) f32  — single load feeds deg, mask, and (cast) matmul
    wlin_t = wlin_t_ref[...]  # (D, D) bf16 = W_lin^T
    blin = blin_ref[...]      # (1, D) f32
    wbi_e = wbi_e_ref[...]    # (D, D) bf16 = (W_Qe / sqrt(D)) @ W_Ke^T
    wbi_n = wbi_n_ref[...]    # (D, D) bf16 = (W_Qn / sqrt(D)) @ W_Kn^T

    deg = jnp.sum(adj, axis=-1, keepdims=True) + 1e-5         # (E, 1) f32
    inv_deg = 1.0 / deg                                        # exact: only E values, error-critical
    # Additive softmax mask: 0 where adj==1, -1e10 where adj==0.  Equivalent to the reference
    # masked_fill as long as every hyperedge has >=1 incident node (guarded by the caller).
    mask_add = (adj - 1.0) * MASK_ABS                           # (E, N) f32

    # --- hyperedge aggregation: (adj @ x) / deg ---
    edge_agg = jnp.dot(_bf16(adj), x16,
                       preferred_element_type=jnp.float32) * inv_deg             # (E, D) f32

    # --- edge linear layer + leaky_relu ---
    # TODO(synk): nn.Dropout not applied (inference semantics; no RNG mask).
    edge_lin = jnp.dot(_bf16(edge_agg), wlin_t,
                       preferred_element_type=jnp.float32) + blin                # (E, D) f32
    edge_lin = _leaky_relu(edge_lin)

    # --- edge attention: softmax_N( edge_lin @ (W_Qe W_Ke^T / sqrt(D)) @ x^T + mask ) ---
    q_e = jnp.dot(_bf16(edge_lin), wbi_e, preferred_element_type=jnp.float32)    # (E, D) f32
    att_e = jnp.einsum('ed,nd->en', _bf16(q_e), x16,
                       preferred_element_type=jnp.float32) + mask_add            # (E, N) f32
    att_e = _softmax_last(att_e)
    edge_fea2 = jnp.dot(_bf16(att_e), x16, preferred_element_type=jnp.float32)   # (E, D) f32
    ef2_16 = _bf16(edge_fea2)

    # --- node attention (unmasked): softmax_E( x @ (W_Qn W_Kn^T / sqrt(D)) @ edge_fea2^T ) ---
    q_n = jnp.dot(x16, wbi_n, preferred_element_type=jnp.float32)                # (N, D) f32
    att_n = _softmax_last(jnp.einsum('nd,ed->ne', _bf16(q_n), ef2_16,
                                     preferred_element_type=jnp.float32))        # (N, E) f32

    out = jnp.dot(_bf16(att_n), ef2_16, preferred_element_type=jnp.float32)      # (N, D) f32
    out_ref[...] = _leaky_relu(out).astype(out_ref.dtype)


def prepare_hgcn_params(params):
    """One-time per-model weight precompute (hoisted out of the per-call path)."""
    D = params["w_lin"].shape[0]
    inv_sqrt_d = 1.0 / math.sqrt(float(D))                      # score scale uses the true D
    wbi_e = (params["wq_e"] * inv_sqrt_d) @ params["wk_e"].T    # (D, D) bilinear fold
    wbi_n = (params["wq_n"] * inv_sqrt_d) @ params["wk_n"].T    # (D, D)
    return {
        "wlin_t": params["w_lin"].T.astype(jnp.bfloat16),
        "blin": params["b_lin"].reshape(1, -1).astype(jnp.float32),
        "wbi_e": wbi_e.astype(jnp.bfloat16),
        "wbi_n": wbi_n.astype(jnp.bfloat16),
    }


def _hgcn_forward_impl(x, adj, wlin_t, blin, wbi_e, wbi_n):
    B, N, D = x.shape
    E = adj.shape[1]

    x16 = x.astype(jnp.bfloat16)        # bf16 MXU operands; cast fuses into the jitted graph
    adj32 = adj.astype(jnp.float32)

    # NOTE(scaling): once weights grow past toy sizes, mark these invariant specs with
    # pipeline_mode=pl.Buffered(1) so they are single-buffered (frees VMEM for bigger tiles).
    const = lambda shape: pl.BlockSpec(shape, lambda b: (0,) * len(shape))

    return pl.pallas_call(
        hgcn_kernel,
        out_shape=jax.ShapeDtypeStruct((B, N, D), jnp.float32),
        grid_spec=pltpu.PrefetchScalarGridSpec(
            num_scalar_prefetch=0,
            grid=(B,),                                # >=2 steps -> shards across both v7x TCs
            in_specs=[
                pl.BlockSpec((None, N, D), lambda b: (b, 0, 0)),   # x   (batch squeezed)
                pl.BlockSpec((None, E, N), lambda b: (b, 0, 0)),   # adj (batch squeezed)
                const((D, D)),                                     # W_lin^T  (bf16)
                const((1, D)),                                     # bias     (f32)
                const((D, D)),                                     # bilinear, edge attention
                const((D, D)),                                     # bilinear, node attention
            ],
            out_specs=pl.BlockSpec((None, N, D), lambda b: (b, 0, 0)),
        ),
        compiler_params=pltpu.CompilerParams(
            dimension_semantics=("parallel",)),
    )(x16, adj32, wlin_t, blin, wbi_e, wbi_n)


hgcn_forward = jax.jit(_hgcn_forward_impl)


# ---------------- pure-JAX reference (mirrors the PyTorch forward, f32) ----------------
def hgcn_reference(x, adj, params):
    D = x.shape[-1]
    deg = jnp.sum(adj, axis=-1, keepdims=True) + 1e-5
    edge_fea = jnp.matmul(adj, x) / deg
    edge_fea = _leaky_relu(jnp.matmul(edge_fea, params["w_lin"].T) + params["b_lin"])
    # edge attention (mask = adj)
    qwq = jnp.matmul(edge_fea, params["wq_e"])
    kwk = jnp.matmul(x, params["wk_e"])
    att_e = jnp.matmul(qwq, jnp.swapaxes(kwk, -1, -2))
    att_e = jnp.where(adj == 1.0, att_e, MASK_FILL)
    att_e = jax.nn.softmax(att_e / jnp.sqrt(float(D)), axis=-1)
    edge_fea2 = jnp.matmul(att_e, x)
    # node attention (no mask)
    qwq_n = jnp.matmul(x, params["wq_n"])
    kwk_n = jnp.matmul(edge_fea2, params["wk_n"])
    att_n = jax.nn.softmax(jnp.matmul(qwq_n, jnp.swapaxes(kwk_n, -1, -2)) / jnp.sqrt(float(D)),
                           axis=-1)
    return _leaky_relu(jnp.matmul(att_n, edge_fea2))


def _xavier_uniform(key, shape, gain):
    fan_in, fan_out = shape
    bound = gain * math.sqrt(6.0 / (fan_in + fan_out))
    return jax.random.uniform(key, shape, jnp.float32, -bound, bound)


if __name__ == "__main__":
    B, N, E, D, H = 2, 16, 8, 32, 32   # in_dim = D, hid_dim = H

    key = jax.random.PRNGKey(0)
    k_x, k_adj, k_wl, k_bl, k_qe, k_ke, k_qn, k_kn = jax.random.split(key, 8)

    x = jax.random.normal(k_x, (B, N, D), jnp.float32)
    adj = (jax.random.uniform(k_adj, (B, E, N)) > 0.5).astype(jnp.float32)
    # Guard: every hyperedge must have >=1 incident node.  Required for the additive mask to
    # be softmax-equivalent to the reference's masked_fill, and for the masked softmax / degree
    # normalization to be well defined (typical hypergraph data satisfies this).
    adj = adj.at[:, :, 0].set(1.0)

    gain = 1.414
    lin_bound = 1.0 / math.sqrt(D)     # PyTorch Linear default init range
    params = {
        "w_lin": jax.random.uniform(k_wl, (D, D), jnp.float32, -lin_bound, lin_bound),
        "b_lin": jax.random.uniform(k_bl, (D,), jnp.float32, -lin_bound, lin_bound),
        "wq_e": _xavier_uniform(k_qe, (D, H), gain),
        "wk_e": _xavier_uniform(k_ke, (D, H), gain),
        "wq_n": _xavier_uniform(k_qn, (D, H), gain),
        "wk_n": _xavier_uniform(k_kn, (D, H), gain),
    }

    prep = prepare_hgcn_params(params)     # one-time, per-model (hoisted out of per-call path)

    out = jax.block_until_ready(
        hgcn_forward(x, adj, prep["wlin_t"], prep["blin"], prep["wbi_e"], prep["wbi_n"]))
    ref = jax.block_until_ready(hgcn_reference(x, adj, params))

    assert out.shape == (B, N, D)
    # Tolerance: exact inv_deg removes the previous approx-reciprocal error; the remaining
    # difference vs the f32 reference comes from bf16 MXU operands (~0.4% per matmul, f32
    # accumulation) compounded across six chained matmuls, plus the EUP softmax reciprocal.
    assert jnp.allclose(out, ref, atol=2e-2, rtol=2e-2), "mismatch vs reference"
    print("KERNEL_OK")
</pallas_src>

<mosaic_0001>
module attributes {stable_mosaic.version = 11 : i64} {
  func.func @hgcn_kernel(%arg0: i32, %arg1: memref<1x16x32xbf16, #tpu.memory_space<vmem>>, %arg2: memref<1x8x16xf32, #tpu.memory_space<vmem>>, %arg3: memref<32x32xbf16, #tpu.memory_space<vmem>>, %arg4: memref<1x32xf32, #tpu.memory_space<vmem>>, %arg5: memref<32x32xbf16, #tpu.memory_space<vmem>>, %arg6: memref<32x32xbf16, #tpu.memory_space<vmem>>, %arg7: memref<1x16x32xf32, #tpu.memory_space<vmem>>) attributes {dimension_semantics = [#tpu.dimension_semantics<parallel>], iteration_bounds = array<i64: 2>, scalar_prefetch = 0 : i64, scratch_operands = 0 : i64, tpu.core_type = #tpu.core_type<tc>, window_params = [{transform_indices = @transform_0, window_bounds = array<i64: 1, 16, 32>}, {transform_indices = @transform_1, window_bounds = array<i64: 1, 8, 16>}, {pipeline_mode = #tpu.pipeline_mode<synchronous>, transform_indices = @transform_2, window_bounds = array<i64: 32, 32>}, {pipeline_mode = #tpu.pipeline_mode<synchronous>, transform_indices = @transform_3, window_bounds = array<i64: 1, 32>}, {pipeline_mode = #tpu.pipeline_mode<synchronous>, transform_indices = @transform_4, window_bounds = array<i64: 32, 32>}, {pipeline_mode = #tpu.pipeline_mode<synchronous>, transform_indices = @transform_5, window_bounds = array<i64: 32, 32>}, {transform_indices = @transform_6, window_bounds = array<i64: 1, 16, 32>}]} {
    %c0 = arith.constant 0 : index
    %c0_0 = arith.constant 0 : index
    %c0_1 = arith.constant 0 : index
    %0 = vector.load %arg1[%c0, %c0_0, %c0_1] : memref<1x16x32xbf16, #tpu.memory_space<vmem>>, vector<1x16x32xbf16>
    %1 = vector.shape_cast %0 : vector<1x16x32xbf16> to vector<16x32xbf16>
    %c0_2 = arith.constant 0 : index
    %c0_3 = arith.constant 0 : index
    %c0_4 = arith.constant 0 : index
    %2 = vector.load %arg2[%c0_2, %c0_3, %c0_4] : memref<1x8x16xf32, #tpu.memory_space<vmem>>, vector<1x8x16xf32>
    %3 = vector.shape_cast %2 : vector<1x8x16xf32> to vector<8x16xf32>
    %c0_5 = arith.constant 0 : index
    %c0_6 = arith.constant 0 : index
    %4 = vector.load %arg3[%c0_5, %c0_6] : memref<32x32xbf16, #tpu.memory_space<vmem>>, vector<32x32xbf16>
    %c0_7 = arith.constant 0 : index
    %c0_8 = arith.constant 0 : index
    %5 = vector.load %arg4[%c0_7, %c0_8] : memref<1x32xf32, #tpu.memory_space<vmem>>, vector<1x32xf32>
    %c0_9 = arith.constant 0 : index
    %c0_10 = arith.constant 0 : index
    %6 = vector.load %arg5[%c0_9, %c0_10] : memref<32x32xbf16, #tpu.memory_space<vmem>>, vector<32x32xbf16>
    %c0_11 = arith.constant 0 : index
    %c0_12 = arith.constant 0 : index
    %7 = vector.load %arg6[%c0_11, %c0_12] : memref<32x32xbf16, #tpu.memory_space<vmem>>, vector<32x32xbf16>
    %cst = arith.constant dense<0.000000e+00> : vector<8xf32>
    %8 = vector.multi_reduction <add>, %3, %cst [1] : vector<8x16xf32> to vector<8xf32>
    %9 = vector.shape_cast %8 : vector<8xf32> to vector<8x1xf32>
    %cst_13 = arith.constant 9.99999974E-6 : f32
    %10 = vector.broadcast %cst_13 : f32 to vector<8x1xf32>
    %11 = arith.addf %9, %10 : vector<8x1xf32>
    %cst_14 = arith.constant 1.000000e+00 : f32
    %12 = vector.broadcast %cst_14 : f32 to vector<8x1xf32>
    %13 = arith.divf %12, %11 : vector<8x1xf32>
    %cst_15 = arith.constant 1.000000e+00 : f32
    %14 = vector.broadcast %cst_15 : f32 to vector<8x16xf32>
    %15 = arith.subf %3, %14 : vector<8x16xf32>
    %cst_16 = arith.constant 1.000000e+10 : f32
    %16 = vector.broadcast %cst_16 : f32 to vector<8x16xf32>
    %17 = arith.mulf %15, %16 : vector<8x16xf32>
    %18 = arith.truncf %3 : vector<8x16xf32> to vector<8x16xbf16>
    %cst_17 = arith.constant dense<0.000000e+00> : vector<8x32xf32>
    %19 = tpu.matmul %18, %1, %cst_17 {dimension_numbers = #tpu.dot_dimension_numbers<[1], [0], [0], [1], [0, 0, 1, 1], [], []>} : vector<8x16xbf16>, vector<16x32xbf16>, vector<8x32xf32> -> vector<8x32xf32>
    %20 = vector.broadcast %13 : vector<8x1xf32> to vector<8x32xf32>
    %21 = arith.mulf %19, %20 : vector<8x32xf32>
    %22 = arith.truncf %21 : vector<8x32xf32> to vector<8x32xbf16>
    %cst_18 = arith.constant dense<0.000000e+00> : vector<8x32xf32>
    %23 = tpu.matmul %22, %4, %cst_18 {dimension_numbers = #tpu.dot_dimension_numbers<[1], [0], [0], [1], [0, 0, 1, 1], [], []>} : vector<8x32xbf16>, vector<32x32xbf16>, vector<8x32xf32> -> vector<8x32xf32>
    %24 = vector.broadcast %5 : vector<1x32xf32> to vector<8x32xf32>
    %25 = arith.addf %23, %24 : vector<8x32xf32>
    %cst_19 = arith.constant 0.000000e+00 : f32
    %26 = vector.broadcast %cst_19 : f32 to vector<8x32xf32>
    %27 = arith.cmpf ogt, %25, %26 : vector<8x32xf32>
    %cst_20 = arith.constant 0.00999999977 : f32
    %28 = vector.broadcast %cst_20 : f32 to vector<8x32xf32>
    %29 = arith.mulf %28, %25 : vector<8x32xf32>
    %30 = arith.select %27, %25, %29 : vector<8x32xi1>, vector<8x32xf32>
    %31 = arith.truncf %30 : vector<8x32xf32> to vector<8x32xbf16>
    %cst_21 = arith.constant dense<0.000000e+00> : vector<8x32xf32>
    %32 = tpu.matmul %31, %6, %cst_21 {dimension_numbers = #tpu.dot_dimension_numbers<[1], [0], [0], [1], [0, 0, 1, 1], [], []>} : vector<8x32xbf16>, vector<32x32xbf16>, vector<8x32xf32> -> vector<8x32xf32>
    %33 = arith.truncf %32 : vector<8x32xf32> to vector<8x32xbf16>
    "tpu.trace_start"() <{level = 10 : i32, message = "ed,nd->en"}> : () -> ()
    %cst_22 = arith.constant dense<0.000000e+00> : vector<8x16xf32>
    %34 = tpu.matmul %33, %1, %cst_22 {dimension_numbers = #tpu.dot_dimension_numbers<[1], [1], [0], [0], [0, 0, 1, 0], [], []>} : vector<8x32xbf16>, vector<16x32xbf16>, vector<8x16xf32> -> vector<8x16xf32>
    "tpu.trace_stop"() : () -> ()
    %35 = arith.addf %34, %17 : vector<8x16xf32>
    %cst_23 = arith.constant dense<0xFF800000> : vector<8xf32>
    %36 = vector.multi_reduction <maximumf>, %35, %cst_23 [1] : vector<8x16xf32> to vector<8xf32>
    %37 = vector.shape_cast %36 : vector<8xf32> to vector<8x1xf32>
    %38 = vector.broadcast %37 : vector<8x1xf32> to vector<8x16xf32>
    %39 = arith.subf %35, %38 : vector<8x16xf32>
    %40 = math.exp %39 : vector<8x16xf32>
    %cst_24 = arith.constant dense<0.000000e+00> : vector<8xf32>
    %41 = vector.multi_reduction <add>, %40, %cst_24 [1] : vector<8x16xf32> to vector<8xf32>
    %42 = vector.shape_cast %41 : vector<8xf32> to vector<8x1xf32>
    %43 = tpu.reciprocal %42 {approx = true} : vector<8x1xf32> -> vector<8x1xf32>
    %44 = vector.broadcast %43 : vector<8x1xf32> to vector<8x16xf32>
    %45 = arith.mulf %40, %44 : vector<8x16xf32>
    %46 = arith.truncf %45 : vector<8x16xf32> to vector<8x16xbf16>
    %cst_25 = arith.constant dense<0.000000e+00> : vector<8x32xf32>
    %47 = tpu.matmul %46, %1, %cst_25 {dimension_numbers = #tpu.dot_dimension_numbers<[1], [0], [0], [1], [0, 0, 1, 1], [], []>} : vector<8x16xbf16>, vector<16x32xbf16>, vector<8x32xf32> -> vector<8x32xf32>
    %48 = arith.truncf %47 : vector<8x32xf32> to vector<8x32xbf16>
    %cst_26 = arith.constant dense<0.000000e+00> : vector<16x32xf32>
    %49 = tpu.matmul %1, %7, %cst_26 {dimension_numbers = #tpu.dot_dimension_numbers<[1], [0], [0], [1], [0, 0, 1, 1], [], []>} : vector<16x32xbf16>, vector<32x32xbf16>, vector<16x32xf32> -> vector<16x32xf32>
    %50 = arith.truncf %49 : vector<16x32xf32> to vector<16x32xbf16>
    "tpu.trace_start"() <{level = 10 : i32, message = "nd,ed->ne"}> : () -> ()
    %cst_27 = arith.constant dense<0.000000e+00> : vector<16x8xf32>
    %51 = tpu.matmul %50, %48, %cst_27 {dimension_numbers = #tpu.dot_dimension_numbers<[1], [1], [0], [0], [0, 0, 1, 0], [], []>} : vector<16x32xbf16>, vector<8x32xbf16>, vector<16x8xf32> -> vector<16x8xf32>
    "tpu.trace_stop"() : () -> ()
    %cst_28 = arith.constant dense<0xFF800000> : vector<16xf32>
    %52 = vector.multi_reduction <maximumf>, %51, %cst_28 [1] : vector<16x8xf32> to vector<16xf32>
    %53 = vector.shape_cast %52 : vector<16xf32> to vector<16x1xf32>
    %54 = vector.broadcast %53 : vector<16x1xf32> to vector<16x8xf32>
    %55 = arith.subf %51, %54 : vector<16x8xf32>
    %56 = math.exp %55 : vector<16x8xf32>
    %cst_29 = arith.constant dense<0.000000e+00> : vector<16xf32>
    %57 = vector.multi_reduction <add>, %56, %cst_29 [1] : vector<16x8xf32> to vector<16xf32>
    %58 = vector.shape_cast %57 : vector<16xf32> to vector<16x1xf32>
    %59 = tpu.reciprocal %58 {approx = true} : vector<16x1xf32> -> vector<16x1xf32>
    %60 = vector.broadcast %59 : vector<16x1xf32> to vector<16x8xf32>
    %61 = arith.mulf %56, %60 : vector<16x8xf32>
    %62 = arith.truncf %61 : vector<16x8xf32> to vector<16x8xbf16>
    %cst_30 = arith.constant dense<0.000000e+00> : vector<16x32xf32>
    %63 = tpu.matmul %62, %48, %cst_30 {dimension_numbers = #tpu.dot_dimension_numbers<[1], [0], [0], [1], [0, 0, 1, 1], [], []>} : vector<16x8xbf16>, vector<8x32xbf16>, vector<16x32xf32> -> vector<16x32xf32>
    %cst_31 = arith.constant 0.000000e+00 : f32
    %64 = vector.broadcast %cst_31 : f32 to vector<16x32xf32>
    %65 = arith.cmpf ogt, %63, %64 : vector<16x32xf32>
    %cst_32 = arith.constant 0.00999999977 : f32
    %66 = vector.broadcast %cst_32 : f32 to vector<16x32xf32>
    %67 = arith.mulf %66, %63 : vector<16x32xf32>
    %68 = arith.select %65, %63, %67 : vector<16x32xi1>, vector<16x32xf32>
    %c0_33 = arith.constant 0 : index
    %c0_34 = arith.constant 0 : index
    %c0_35 = arith.constant 0 : index
    %69 = vector.load %arg7[%c0_33, %c0_34, %c0_35] : memref<1x16x32xf32, #tpu.memory_space<vmem>>, vector<1x16x32xf32>
    %70 = vector.shape_cast %69 : vector<1x16x32xf32> to vector<16x32xf32>
    %71 = vector.shape_cast %68 : vector<16x32xf32> to vector<1x16x32xf32>
    tpu.vector_store %arg7[%c0_33, %c0_34, %c0_35], %71 {strides = array<i32>} : memref<1x16x32xf32, #tpu.memory_space<vmem>>, vector<1x16x32xf32>,
    return
  }
  func.func @transform_0(%arg0: i32) -> (i32, i32, i32) {
    %c0_i32 = arith.constant 0 : i32
    %c0_i32_0 = arith.constant 0 : i32
    %c0_i32_1 = arith.constant 0 : i32
    return %arg0, %c0_i32, %c0_i32_0 : i32, i32, i32
  }
  func.func @transform_1(%arg0: i32) -> (i32, i32, i32) {
    %c0_i32 = arith.constant 0 : i32
    %c0_i32_0 = arith.constant 0 : i32
    %c0_i32_1 = arith.constant 0 : i32
    return %arg0, %c0_i32, %c0_i32_0 : i32, i32, i32
  }
  func.func @transform_2(%arg0: i32) -> (i32, i32) {
    %c0_i32 = arith.constant 0 : i32
    %c0_i32_0 = arith.constant 0 : i32
    %c0_i32_1 = arith.constant 0 : i32
    return %c0_i32, %c0_i32_0 : i32, i32
  }
  func.func @transform_3(%arg0: i32) -> (i32, i32) {
    %c0_i32 = arith.constant 0 : i32
    %c0_i32_0 = arith.constant 0 : i32
    %c0_i32_1 = arith.constant 0 : i32
    return %c0_i32, %c0_i32_0 : i32, i32
  }
  func.func @transform_4(%arg0: i32) -> (i32, i32) {
    %c0_i32 = arith.constant 0 : i32
    %c0_i32_0 = arith.constant 0 : i32
    %c0_i32_1 = arith.constant 0 : i32
    return %c0_i32, %c0_i32_0 : i32, i32
  }
  func.func @transform_5(%arg0: i32) -> (i32, i32) {
    %c0_i32 = arith.constant 0 : i32
    %c0_i32_0 = arith.constant 0 : i32
    %c0_i32_1 = arith.constant 0 : i32
    return %c0_i32, %c0_i32_0 : i32, i32
  }
  func.func @transform_6(%arg0: i32) -> (i32, i32, i32) {
    %c0_i32 = arith.constant 0 : i32
    %c0_i32_0 = arith.constant 0 : i32
    %c0_i32_1 = arith.constant 0 : i32
    return %arg0, %c0_i32, %c0_i32_0 : i32, i32, i32
  }
}

</mosaic_0001>

<llo_original>
// kernel: _hgcn_forward_impl.1
$region0: #{_hgcn_forward_impl.1}
  #allocation0 [shape = 'u32[]', space=smem, size = 0x4, offset = 0x4, fixed_abs, tag = 'smem constant byte address 0x4 - core index']
  #allocation1 [shape = 'u32[144,128]{1,0:T(1,128)}', space=vmem, size = 0x12000, scoped, tag = 'internal scratch']
  %s0 = inlined_call_operand.vmem [shape: bf16[2,16,32], index: 0, kind: input, shape index: {}]
  %s1 = inlined_call_operand.vmem [shape: f32[2,8,16], index: 1, kind: input, shape index: {}]
  %s2 = inlined_call_operand.vmem [shape: bf16[32,32], index: 2, kind: input, shape index: {}]
  %s3 = inlined_call_operand.vmem [shape: f32[1,32], index: 3, kind: input, shape index: {}]
  %s4 = inlined_call_operand.vmem [shape: bf16[32,32], index: 4, kind: input, shape index: {}]
  %s5 = inlined_call_operand.hbm [shape: bf16[32,32], index: 5, kind: input, shape index: {}]
  %s6 = inlined_call_operand.hbm [shape: f32[2,16,32], index: 6, kind: output, shape index: {}]
  %s7 = sld [smem:[#allocation0]]
  $region61: #{_hgcn_forward_impl.1} parent=0
    _
  %s9 = ssub.s32 1, %s7
  %s10 = scalar_select 0, %s9, %s7
  $region1: #{_hgcn_forward_impl.1} parent=0
    #allocation2 [shape = 'u8[8192]{0}', space=vmem, size = 0x2000, scoped, tag = 'input window, operand 5, single buffered']
    #allocation3 [shape = 's32[2]{0}', space=sflag, size = 0x8, scoped, tag = 'scoped memory for _hgcn_forward_impl.1']
    #allocation4 [shape = 's32[2]{0}', space=sflag, size = 0x8, scoped, tag = 'scoped memory for _hgcn_forward_impl.1']
    #allocation5 [shape = 'u8[16384]{0}', space=vmem, size = 0x4000, scoped, tag = 'output window, operand 0']
    %11 = vsyncpa [#allocation3], 0
    %12 = vsyncpa [#allocation4], 0
    %s13 = scalar_lea.sflag [#allocation4], 1
    %14 = vsyncpa %s13, 0
    loop: start=0, step=1, limit=4
    $region2: #{_hgcn_forward_impl.1} parent=1 // loop_pre_header
      _
    $region3: #{_hgcn_forward_impl.1} parent=1 // loop_header
      %s16 = sphi 0, %s20
      %p17 = scmp.ge.s32.totalorder %s16, 4
      %s26 = sphi 0, %s28
      %s29 = sphi 0, %s26
      %s30 = sphi 0, %s29
      %s46 = sphi 0, %s30
      %s52 = sphi 0, %s54
      %s55 = sphi 0, %s52
      %s56 = sphi 0, %s55
      %s72 = sphi 0, %s56
      %s76 = sphi 0, %s76
      %s78 = sphi 0, %s76
      %s79 = sphi 0, %s78
      %s93 = sphi 0, %s79
      %s97 = sphi 0, %s97
      %s99 = sphi 0, %s97
      %s100 = sphi 0, %s99
      %s114 = sphi 0, %s100
      %s118 = sphi 0, %s118
      %s120 = sphi 0, %s118
      %s121 = sphi 0, %s120
      %s135 = sphi 0, %s121
      %s139 = sphi 0, %s139
      %s141 = sphi 0, %s139
      %s142 = sphi 0, %s141
      %s156 = sphi 0, %s142
      %s162 = sphi 0, %s164
      %s165 = sphi 0, %s162
      %s166 = sphi 0, %s165
      %s182 = sphi 0, %s166
    $region4: #{_hgcn_forward_impl.1} parent=1 // loop_header_branch
      %19 = sbr.rel (%p17) target = $region8
    $region5: #{_hgcn_forward_impl.1} parent=1 // loop_body
      %s21 = ssub.s32 %s16, 1
      %s22 = ssub.s32 %s16, 2
      %s23 = sadd.s32 %s16, 1
      %s24 = ssub.s32 %s16, %s23
      %p25 = scmp.eq.s32.totalorder %s24, 0
      %s27 = sadd.s32 %s26, 1
      %s28 = scalar_select %p25, %s26, %s27
      %p31 = pneg %p25
      %p32 = scmp.eq.s32.totalorder %s16, 1
      %p33 = por %p31, %p32
      %p34 = scmp.ne.s32.totalorder %s26, %s29
      %p35 = scmp.eq.s32.totalorder %s16, 0
      %p36 = por %p34, %p35
      %p37 = scmp.ne.s32.totalorder %s26, %s29
      %p38 = scmp.eq.s32.totalorder %s21, 1
      %p39 = por %p37, %p38
      %p40 = scmp.ne.s32.totalorder %s29, %s30
      %p41 = scmp.eq.s32.totalorder %s21, 0
      %p42 = por %p40, %p41
      %p43 = scmp.ne.s32.totalorder %s29, %s30
      %p44 = scmp.eq.s32.totalorder %s22, 1
      %p45 = por %p43, %p44
      %p47 = scmp.ne.s32.totalorder %s30, %s46
      %p48 = scmp.eq.s32.totalorder %s22, 0
      %p49 = por %p47, %p48
      %s50 = ssub.s32 %s16, %s23
      %p51 = scmp.eq.s32.totalorder %s50, 0
      %s53 = sadd.s32 %s52, 1
      %s54 = scalar_select %p51, %s52, %s53
      %p57 = pneg %p51
      %p58 = scmp.eq.s32.totalorder %s16, 1
      %p59 = por %p57, %p58
      %p60 = scmp.ne.s32.totalorder %s52, %s55
      %p61 = scmp.eq.s32.totalorder %s16, 0
      %p62 = por %p60, %p61
      %p63 = scmp.ne.s32.totalorder %s52, %s55
      %p64 = scmp.eq.s32.totalorder %s21, 1
      %p65 = por %p63, %p64
      %p66 = scmp.ne.s32.totalorder %s55, %s56
      %p67 = scmp.eq.s32.totalorder %s21, 0
      %p68 = por %p66, %p67
      %p69 = scmp.ne.s32.totalorder %s55, %s56
      %p70 = scmp.eq.s32.totalorder %s22, 1
      %p71 = por %p69, %p70
      %p73 = scmp.ne.s32.totalorder %s56, %s72
      %p74 = scmp.eq.s32.totalorder %s22, 0
      %p75 = por %p73, %p74
      %s77 = sadd.s32 %s76, 1
      %p80 = scmp.eq.s32.totalorder %s16, 1
      %p81 = scmp.ne.s32.totalorder %s76, %s78
      %p82 = scmp.eq.s32.totalorder %s16, 0
      %p83 = por %p81, %p82
      %p84 = scmp.ne.s32.totalorder %s76, %s78
      %p85 = scmp.eq.s32.totalorder %s21, 1
      %p86 = por %p84, %p85
      %p87 = scmp.ne.s32.totalorder %s78, %s79
      %p88 = scmp.eq.s32.totalorder %s21, 0
      %p89 = por %p87, %p88
      %p90 = scmp.ne.s32.totalorder %s78, %s79
      %p91 = scmp.eq.s32.totalorder %s22, 1
      %p92 = por %p90, %p91
      %p94 = scmp.ne.s32.totalorder %s79, %s93
      %p95 = scmp.eq.s32.totalorder %s22, 0
      %p96 = por %p94, %p95
      %s98 = sadd.s32 %s97, 1
      %p101 = scmp.eq.s32.totalorder %s16, 1
      %p102 = scmp.ne.s32.totalorder %s97, %s99
      %p103 = scmp.eq.s32.totalorder %s16, 0
      %p104 = por %p102, %p103
      %p105 = scmp.ne.s32.totalorder %s97, %s99
      %p106 = scmp.eq.s32.totalorder %s21, 1
      %p107 = por %p105, %p106
      %p108 = scmp.ne.s32.totalorder %s99, %s100
      %p109 = scmp.eq.s32.totalorder %s21, 0
      %p110 = por %p108, %p109
      %p111 = scmp.ne.s32.totalorder %s99, %s100
      %p112 = scmp.eq.s32.totalorder %s22, 1
      %p113 = por %p111, %p112
      %p115 = scmp.ne.s32.totalorder %s100, %s114
      %p116 = scmp.eq.s32.totalorder %s22, 0
      %p117 = por %p115, %p116
      %s119 = sadd.s32 %s118, 1
      %p122 = scmp.eq.s32.totalorder %s16, 1
      %p123 = scmp.ne.s32.totalorder %s118, %s120
      %p124 = scmp.eq.s32.totalorder %s16, 0
      %p125 = por %p123, %p124
      %p126 = scmp.ne.s32.totalorder %s118, %s120
      %p127 = scmp.eq.s32.totalorder %s21, 1
      %p128 = por %p126, %p127
      %p129 = scmp.ne.s32.totalorder %s120, %s121
      %p130 = scmp.eq.s32.totalorder %s21, 0
      %p131 = por %p129, %p130
      %p132 = scmp.ne.s32.totalorder %s120, %s121
      %p133 = scmp.eq.s32.totalorder %s22, 1
      %p134 = por %p132, %p133
      %p136 = scmp.ne.s32.totalorder %s121, %s135
      %p137 = scmp.eq.s32.totalorder %s22, 0
      %p138 = por %p136, %p137
      %s140 = sadd.s32 %s139, 1
      %p143 = scmp.eq.s32.totalorder %s16, 1
      %p144 = scmp.ne.s32.totalorder %s139, %s141
      %p145 = scmp.eq.s32.totalorder %s16, 0
      %p146 = por %p144, %p145
      %p147 = scmp.ne.s32.totalorder %s139, %s141
      %p148 = scmp.eq.s32.totalorder %s21, 1
      %p149 = por %p147, %p148
      %p150 = scmp.ne.s32.totalorder %s141, %s142
      %p151 = scmp.eq.s32.totalorder %s21, 0
      %p152 = por %p150, %p151
      %p153 = scmp.ne.s32.totalorder %s141, %s142
      %p154 = scmp.eq.s32.totalorder %s22, 1
      %p155 = por %p153, %p154
      %p157 = scmp.ne.s32.totalorder %s142, %s156
      %p158 = scmp.eq.s32.totalorder %s22, 0
      %p159 = por %p157, %p158
      %s160 = ssub.s32 %s16, %s23
      %p161 = scmp.eq.s32.totalorder %s160, 0
      %s163 = sadd.s32 %s162, 1
      %s164 = scalar_select %p161, %s162, %s163
      %p167 = pneg %p161
      %p168 = scmp.eq.s32.totalorder %s16, 1
      %p169 = por %p167, %p168
      %p170 = scmp.ne.s32.totalorder %s162, %s165
      %p171 = scmp.eq.s32.totalorder %s16, 0
      %p172 = por %p170, %p171
      %p173 = scmp.ne.s32.totalorder %s162, %s165
      %p174 = scmp.eq.s32.totalorder %s21, 1
      %p175 = por %p173, %p174
      %p176 = scmp.ne.s32.totalorder %s165, %s166
      %p177 = scmp.eq.s32.totalorder %s21, 0
      %p178 = por %p176, %p177
      %p179 = scmp.ne.s32.totalorder %s165, %s166
      %p180 = scmp.eq.s32.totalorder %s22, 1
      %p181 = por %p179, %p180
      %p183 = scmp.ne.s32.totalorder %s166, %s182
      %p184 = scmp.eq.s32.totalorder %s22, 0
      %p185 = por %p183, %p184
      %p186 = scmp.le.s32.totalorder 1, %s16
      %p187 = scmp.lt.s32.totalorder %s16, 3
      %p188 = pnand %p186, %p187
      %p189 = pneg %p188
      // Predicated region
      $region9: #{_hgcn_forward_impl.1} parent=5 // pred_check
        _
      $region10: #{_hgcn_forward_impl.1} parent=5 // pred_check_branch
        %191 = sbr.rel (%p188) target = $region12
      $region11: #{_hgcn_forward_impl.1} parent=5 // pred_region
        %s192 = ssub.s32 %s16, 1
        // Predicated region
        $region13: #{_hgcn_forward_impl.1} parent=11 // pred_check
          %p193 = pneg %p89
        $region14: #{_hgcn_forward_impl.1} parent=11 // pred_check_branch
          %195 = sbr.rel (%p193) target = $region16
        $region15: #{_hgcn_forward_impl.1} parent=11 // pred_region
          _
        $region16: #{_hgcn_forward_impl.1} parent=11 // pred_fallthru
          _
        // Predicated region
        $region17: #{_hgcn_forward_impl.1} parent=11 // pred_check
          %p196 = pneg %p110
        $region18: #{_hgcn_forward_impl.1} parent=11 // pred_check_branch
          %198 = sbr.rel (%p196) target = $region20
        $region19: #{_hgcn_forward_impl.1} parent=11 // pred_region
          _
        $region20: #{_hgcn_forward_impl.1} parent=11 // pred_fallthru
          _
        // Predicated region
        $region21: #{_hgcn_forward_impl.1} parent=11 // pred_check
          %p199 = pneg %p131
        $region22: #{_hgcn_forward_impl.1} parent=11 // pred_check_branch
          %201 = sbr.rel (%p199) target = $region24
        $region23: #{_hgcn_forward_impl.1} parent=11 // pred_region
          _
        $region24: #{_hgcn_forward_impl.1} parent=11 // pred_fallthru
          _
        // Predicated region
        $region25: #{_hgcn_forward_impl.1} parent=11 // pred_check
          %p202 = pneg %p152
        $region26: #{_hgcn_forward_impl.1} parent=11 // pred_check_branch
          %204 = sbr.rel (%p202) target = $region28
        $region27: #{_hgcn_forward_impl.1} parent=11 // pred_region
          %s206 = ssub.s32 256, 256
          %207 = vsyncadd [#allocation3], %s206
          %s208 = sshll.u32 [#allocation2], 4
          %s209 = int_to_ptr.vmem [resolvable:$true] %s208
          %214 = dma.hbm_to_vmem [thread:$0]  %s5, 256, %s209, [#allocation3], 64, 64, 4
        $region28: #{_hgcn_forward_impl.1} parent=11 // pred_fallthru
          _
      $region12: #{_hgcn_forward_impl.1} parent=5 // pred_fallthru
        _
      %p215 = scmp.lt.s32.totalorder %s16, 2
      // Predicated region
      $region29: #{_hgcn_forward_impl.1} parent=5 // pred_check
        %p216 = pneg %p215
      $region30: #{_hgcn_forward_impl.1} parent=5 // pred_check_branch
        %218 = sbr.rel (%p216) target = $region32
      $region31: #{_hgcn_forward_impl.1} parent=5 // pred_region
        // Predicated region
        $region33: #{_hgcn_forward_impl.1} parent=31 // pred_check
          %p219 = pneg %p36
        $region34: #{_hgcn_forward_impl.1} parent=31 // pred_check_branch
          %221 = sbr.rel (%p219) target = $region36
        $region35: #{_hgcn_forward_impl.1} parent=31 // pred_region
          %p222 = scmp.lt.s32.totalorder %s16, 1
          %s223 = scalar_select %p222, %s16, 1
          %s224 = smul.addr %s223, 2
          %s225 = smul.addr %s224, 4
          %s226 = scalar_lea.vmem %s0, %s225
        $region36: #{_hgcn_forward_impl.1} parent=31 // pred_fallthru
          _
        // Predicated region
        $region37: #{_hgcn_forward_impl.1} parent=31 // pred_check
          %p227 = pneg %p62
        $region38: #{_hgcn_forward_impl.1} parent=31 // pred_check_branch
          %229 = sbr.rel (%p227) target = $region40
        $region39: #{_hgcn_forward_impl.1} parent=31 // pred_region
          %p230 = scmp.lt.s32.totalorder %s16, 1
          %s231 = scalar_select %p230, %s16, 1
          %s232 = smul.addr %s231, 8
          %s233 = scalar_lea.vmem %s1, %s232
        $region40: #{_hgcn_forward_impl.1} parent=31 // pred_fallthru
          _
      $region32: #{_hgcn_forward_impl.1} parent=5 // pred_fallthru
        _
      %p234 = scmp.le.s32.totalorder 1, %s16
      %p235 = scmp.lt.s32.totalorder %s16, 3
      %p236 = pnand %p234, %p235
      %p237 = pneg %p236
      // Predicated region
      $region41: #{_hgcn_forward_impl.1} parent=5 // pred_check
        _
      $region42: #{_hgcn_forward_impl.1} parent=5 // pred_check_branch
        %239 = sbr.rel (%p236) target = $region44
      $region43: #{_hgcn_forward_impl.1} parent=5 // pred_region
        %s240 = ssub.s32 %s16, 1
        // Predicated region
        $region45: #{_hgcn_forward_impl.1} parent=43 // pred_check
          %p241 = pneg %p152
        $region46: #{_hgcn_forward_impl.1} parent=43 // pred_check_branch
          %243 = sbr.rel (%p241) target = $region48
        $region47: #{_hgcn_forward_impl.1} parent=43 // pred_region
          %244 = dma.done [#allocation3], 256
        $region48: #{_hgcn_forward_impl.1} parent=43 // pred_fallthru
          _
        %p245 = scmp.lt.s32.totalorder %s21, 1
        %s246 = scalar_select %p245, %s21, 1
        %s247 = smul.addr %s246, 2
        %s248 = smul.addr %s247, 4
        %s249 = scalar_lea.vmem %s0, %s248
        %p250 = pneg %p42
        %p251 = pneg %p39
        %p252 = scmp.lt.s32.totalorder %s21, 1
        %s253 = scalar_select %p252, %s21, 1
        %s254 = smul.addr %s253, 8
        %s255 = scalar_lea.vmem %s1, %s254
        %p256 = pneg %p68
        %p257 = pneg %p65
        %p258 = pneg %p89
        %p259 = pneg %p86
        %p260 = pneg %p110
        %p261 = pneg %p107
        %p262 = pneg %p131
        %p263 = pneg %p128
        %p264 = pneg %p152
        %p265 = pneg %p149
        %p266 = pneg %p178
        %p267 = pneg %p175
        %s268 = sand.u32 %s165, 1
        %s269 = scalar_lea.sflag [#allocation4], %s268
        %s270 = sand.u32 %s165, 1
        %s271 = smul.addr %s270, 16
        %s272 = scalar_lea.vmem [#allocation5], %s271
        %p273 = scmp.lt.s32.totalorder %s21, 1
        %s274 = scalar_select %p273, %s21, 1
        %s275 = smul.addr %s274, 2
        %s276 = smul.addr %s275, 4
        %s277 = scalar_lea.vmem %s0, %s276
        %p278 = scmp.lt.s32.totalorder %s21, 1
        %s279 = scalar_select %p278, %s21, 1
        %s280 = smul.addr %s279, 8
        %s281 = scalar_lea.vmem %s1, %s280
        %v283 = vld [vmem:[%s277] sm:$0xf]
        %v284 = vld [vmem:[%s277 + $0x4] sm:$0xf]
        %v285 = vld [vmem:[%s281] sm:$0xff]
        %v286 = vld [vmem:[%s2] sm:$0xf]
        %v287 = vld [vmem:[%s2 + $0x4] sm:$0xf]
        %v288 = vld [vmem:[%s2 + $0x8] sm:$0xf]
        %v289 = vld [vmem:[%s2 + $0xc] sm:$0xf]
        %v290 = vld [vmem:[%s3] sm:$0x1]
        %v291 = vld [vmem:[%s4] sm:$0xf]
        %v292 = vld [vmem:[%s4 + $0x4] sm:$0xf]
        %v293 = vld [vmem:[%s4 + $0x8] sm:$0xf]
        %v294 = vld [vmem:[%s4 + $0xc] sm:$0xf]
        %v295 = vld [vmem:[#allocation2] sm:$0xf]
        %v296 = vld [vmem:[#allocation2 + $0x4] sm:$0xf]
        %v297 = vld [vmem:[#allocation2 + $0x8] sm:$0xf]
        %v298 = vld [vmem:[#allocation2 + $0xc] sm:$0xf]
        %vm299 = vcmask 130048
        %v300 = vsel %vm299, %v285, 0.0
        %301 = vadd.xlane.f32.xlu0 %v300
        %v302 = vpop.xlane.xlu0 %301
        %v303 = vadd.f32 %v302, 1e-05
        %v304 = vrcp.pop %v303
        %v305 = vmul.f32 1.0, %v304
        %v306 = vsub.f32 %v285, 1.0
        %v307 = vmul.f32 %v306, 1e+10
        %v308 = vpack.c.bf16 %v285, %v285
        %v311 = vunpack.c.l.b16 %v283
        %v312 = vunpack.c.l.b16 %v284
        %v313 = vpack.c.b16 %v312, %v311
        %v316 = vsel %vm299, %v308, 0
        %318 = vmatprep.subr.bf16.mxu0 0
        %319 = vmatpush1.bf16.msra.mxu0 0
        %320 = vmatprep.subr.bf16.mxu0 0
        %321 = vmatpush1.bf16.msra.mxu0 0
        %322 = vmatprep.subr.bf16.mxu0 0
        %323 = vmatpush1.bf16.msra.mxu0 0
        %324 = vmatprep.subr.bf16.mxu0 0
        %325 = vmatpush1.bf16.msra.mxu0 0
        %326 = vmatprep.subr.bf16.mxu0 0
        %327 = vmatpush1.bf16.msra.mxu0 0
        %328 = vmatprep.subr.bf16.mxu0 0
        %329 = vmatpush1.bf16.msra.mxu0 0
        %330 = vmatprep.subr.bf16.mxu0 0
        %331 = vmatpush1.bf16.msra.mxu0 0
        %332 = vmatprep.subr.bf16.mxu0 0
        %333 = vmatpush1.bf16.msra.mxu0 %v313
        %334 = vmatprep.subr.bf16.mxu0 0
        %335 = vmatpush2.bf16.msra.mxu0 0
        %336 = vmatprep.subr.bf16.mxu0 0
        %337 = vmatpush2.bf16.msra.mxu0 0
        %338 = vmatprep.subr.bf16.mxu0 0
        %339 = vmatpush2.bf16.msra.mxu0 0
        %340 = vmatprep.subr.bf16.mxu0 0
        %341 = vmatpush2.bf16.msra.mxu0 0
        %342 = vmatprep.subr.bf16.mxu0 0
        %343 = vmatpush2.bf16.msra.mxu0 0
        %344 = vmatprep.subr.bf16.mxu0 0
        %345 = vmatpush2.bf16.msra.mxu0 0
        %346 = vmatprep.subr.bf16.mxu0 0
        %347 = vmatpush2.bf16.msra.mxu0 0
        %348 = vmatprep.subr.bf16.mxu0 0
        %349 = vmatpush2.bf16.msra.mxu0 0
        %350 = vmatprep.mubr.bf16.mxu0 0
        %351 = vmatmul.mubr.bf16.gmra.mxu0 %v316
        %v352 = vpop.f32.mrf.mxu0
        %v353 = vadd.f32 0.0, %v352
        %v354 = vpop.f32.mrf.mxu0
        %v355 = vpop.f32.mrf.mxu0
        %v356 = vpop.f32.mrf.mxu0
        %357 = vdwg.mxu0
        %v358 = vmul.f32 %v353, %v305
        %v359 = vpack.c.bf16 %v358, %v358
        %v361 = vlaneseq
        %v362 = vshrl.u32 %v361, 7
        %v363 = vsub.s32 0, %v362
        %v364 = vrot.slane %v290, %v363
        %v370 = vunpack.c.l.b16 %v286
        %v371 = vunpack.c.l.b16 %v287
        %v372 = vunpack.c.l.b16 %v288
        %v373 = vunpack.c.l.b16 %v289
        %v374 = vpack.c.b16 %v371, %v370
        %v375 = vpack.c.b16 %v373, %v372
        %vm378 = vcmask 261120
        %v380 = vsel %vm378, %v359, 0
        %382 = vmatprep.subr.bf16.mxu0 0
        %383 = vmatpush1.bf16.msra.mxu0 0
        %384 = vmatprep.subr.bf16.mxu0 0
        %385 = vmatpush1.bf16.msra.mxu0 0
        %386 = vmatprep.subr.bf16.mxu0 0
        %387 = vmatpush1.bf16.msra.mxu0 0
        %388 = vmatprep.subr.bf16.mxu0 0
        %389 = vmatpush1.bf16.msra.mxu0 0
        %390 = vmatprep.subr.bf16.mxu0 0
        %391 = vmatpush1.bf16.msra.mxu0 0
        %392 = vmatprep.subr.bf16.mxu0 0
        %393 = vmatpush1.bf16.msra.mxu0 0
        %394 = vmatprep.subr.bf16.mxu0 0
        %395 = vmatpush1.bf16.msra.mxu0 %v375
        %396 = vmatprep.subr.bf16.mxu0 0
        %397 = vmatpush1.bf16.msra.mxu0 %v374
        %398 = vmatprep.subr.bf16.mxu0 0
        %399 = vmatpush2.bf16.msra.mxu0 0
        %400 = vmatprep.subr.bf16.mxu0 0
        %401 = vmatpush2.bf16.msra.mxu0 0
        %402 = vmatprep.subr.bf16.mxu0 0
        %403 = vmatpush2.bf16.msra.mxu0 0
        %404 = vmatprep.subr.bf16.mxu0 0
        %405 = vmatpush2.bf16.msra.mxu0 0
        %406 = vmatprep.subr.bf16.mxu0 0
        %407 = vmatpush2.bf16.msra.mxu0 0
        %408 = vmatprep.subr.bf16.mxu0 0
        %409 = vmatpush2.bf16.msra.mxu0 0
        %410 = vmatprep.subr.bf16.mxu0 0
        %411 = vmatpush2.bf16.msra.mxu0 0
        %412 = vmatprep.subr.bf16.mxu0 0
        %413 = vmatpush2.bf16.msra.mxu0 0
        %414 = vmatprep.mubr.bf16.mxu0 0
        %415 = vmatmul.mubr.bf16.gmra.mxu0 %v380
        %v416 = vpop.f32.mrf.mxu0
        %v417 = vadd.f32 %v364, %v416
        %v418 = vpop.f32.mrf.mxu0
        %v419 = vpop.f32.mrf.mxu0
        %v420 = vpop.f32.mrf.mxu0
        %421 = vdwg.mxu0
        %vm422 = vcmp.gt.f32.partialorder %v417, 0.0
        %v423 = vmul.f32 %v417, 0.01
        %v424 = vsel %vm422, %v417, %v423
        %v425 = vpack.c.bf16 %v424, %v424
        %v430 = vunpack.c.l.b16 %v291
        %v431 = vunpack.c.l.b16 %v292
        %v432 = vunpack.c.l.b16 %v293
        %v433 = vunpack.c.l.b16 %v294
        %v434 = vpack.c.b16 %v431, %v430
        %v435 = vpack.c.b16 %v433, %v432
        %v439 = vsel %vm378, %v425, 0
        %441 = vmatprep.subr.bf16.mxu0 0
        %442 = vmatpush1.bf16.msra.mxu0 0
        %443 = vmatprep.subr.bf16.mxu0 0
        %444 = vmatpush1.bf16.msra.mxu0 0
        %445 = vmatprep.subr.bf16.mxu0 0
        %446 = vmatpush1.bf16.msra.mxu0 0
        %447 = vmatprep.subr.bf16.mxu0 0
        %448 = vmatpush1.bf16.msra.mxu0 0
        %449 = vmatprep.subr.bf16.mxu0 0
        %450 = vmatpush1.bf16.msra.mxu0 0
        %451 = vmatprep.subr.bf16.mxu0 0
        %452 = vmatpush1.bf16.msra.mxu0 0
        %453 = vmatprep.subr.bf16.mxu0 0
        %454 = vmatpush1.bf16.msra.mxu0 %v435
        %455 = vmatprep.subr.bf16.mxu0 0
        %456 = vmatpush1.bf16.msra.mxu0 %v434
        %457 = vmatprep.subr.bf16.mxu0 0
        %458 = vmatpush2.bf16.msra.mxu0 0
        %459 = vmatprep.subr.bf16.mxu0 0
        %460 = vmatpush2.bf16.msra.mxu0 0
        %461 = vmatprep.subr.bf16.mxu0 0
        %462 = vmatpush2.bf16.msra.mxu0 0
        %463 = vmatprep.subr.bf16.mxu0 0
        %464 = vmatpush2.bf16.msra.mxu0 0
        %465 = vmatprep.subr.bf16.mxu0 0
        %466 = vmatpush2.bf16.msra.mxu0 0
        %467 = vmatprep.subr.bf16.mxu0 0
        %468 = vmatpush2.bf16.msra.mxu0 0
        %469 = vmatprep.subr.bf16.mxu0 0
        %470 = vmatpush2.bf16.msra.mxu0 0
        %471 = vmatprep.subr.bf16.mxu0 0
        %472 = vmatpush2.bf16.msra.mxu0 0
        %473 = vmatprep.mubr.bf16.mxu0 0
        %474 = vmatmul.mubr.bf16.gmra.mxu0 %v439
        %v475 = vpop.f32.mrf.mxu0
        %v476 = vadd.f32 0.0, %v475
        %v477 = vpop.f32.mrf.mxu0
        %v478 = vpop.f32.mrf.mxu0
        %v479 = vpop.f32.mrf.mxu0
        %480 = vdwg.mxu0
        %v481 = vpack.c.bf16 %v476, %v476
        %v483 = vsel %vm378, %v481, 0
        %v486 = vsel %vm378, %v313, 0
        %488 = vmatprep.subr.bf16.mxu0 0
        %489 = vmatpush1.bf16.xpose.msra.mxu0 0
        %490 = vmatprep.subr.bf16.mxu0 0
        %491 = vmatpush1.bf16.xpose.msra.mxu0 0
        %492 = vmatprep.subr.bf16.mxu0 0
        %493 = vmatpush1.bf16.xpose.msra.mxu0 0
        %494 = vmatprep.subr.bf16.mxu0 0
        %495 = vmatpush1.bf16.xpose.msra.mxu0 0
        %496 = vmatprep.subr.bf16.mxu0 0
        %497 = vmatpush1.bf16.xpose.msra.mxu0 0
        %498 = vmatprep.subr.bf16.mxu0 0
        %499 = vmatpush1.bf16.xpose.msra.mxu0 0
        %500 = vmatprep.subr.bf16.mxu0 0
        %501 = vmatpush1.bf16.xpose.msra.mxu0 0
        %502 = vmatprep.subr.bf16.mxu0 0
        %503 = vmatpush1.bf16.xpose.msra.mxu0 %v486
        %504 = vmatprep.subr.bf16.mxu0 0
        %505 = vmatpush2.bf16.xpose.msra.mxu0 0
        %506 = vmatprep.subr.bf16.mxu0 0
        %507 = vmatpush2.bf16.xpose.msra.mxu0 0
        %508 = vmatprep.subr.bf16.mxu0 0
        %509 = vmatpush2.bf16.xpose.msra.mxu0 0
        %510 = vmatprep.subr.bf16.mxu0 0
        %511 = vmatpush2.bf16.xpose.msra.mxu0 0
        %512 = vmatprep.subr.bf16.mxu0 0
        %513 = vmatpush2.bf16.xpose.msra.mxu0 0
        %514 = vmatprep.subr.bf16.mxu0 0
        %515 = vmatpush2.bf16.xpose.msra.mxu0 0
        %516 = vmatprep.subr.bf16.mxu0 0
        %517 = vmatpush2.bf16.xpose.msra.mxu0 0
        %518 = vmatprep.subr.bf16.mxu0 0
        %519 = vmatpush2.bf16.xpose.msra.mxu0 0
        %520 = vmatprep.mubr.bf16.mxu0 0
        %521 = vmatmul.mubr.bf16.gmra.mxu0 %v483
        %v522 = vpop.f32.mrf.mxu0
        %v523 = vadd.f32 %v307, %v522
        %v524 = vpop.f32.mrf.mxu0
        %v525 = vpop.f32.mrf.mxu0
        %v526 = vpop.f32.mrf.mxu0
        %527 = vdwg.mxu0
        %v528 = vsel %vm299, %v523, -inf
        %529 = vmax.xlane.f32.xlu0 %v528
        %v530 = vpop.xlane.xlu0 %529
        %v531 = vsub.f32 %v523, %v530
        %v532 = vmul.f32 %v531, 1.442695
        %v533 = vpow.pop %v532
        %v534 = vsel %vm299, %v533, 0.0
        %535 = vadd.xlane.f32.xlu0 %v534
        %v536 = vpop.xlane.xlu0 %535
        %v537 = vrcp.pop %v536
        %v538 = vmul.f32 %v533, %v537
        %v539 = vpack.c.bf16 %v538, %v538
        %v541 = vsel %vm299, %v539, 0
        %543 = vmatprep.subr.bf16.mxu0 0
        %544 = vmatpush1.bf16.msra.mxu0 0
        %545 = vmatprep.subr.bf16.mxu0 0
        %546 = vmatpush1.bf16.msra.mxu0 0
        %547 = vmatprep.subr.bf16.mxu0 0
        %548 = vmatpush1.bf16.msra.mxu0 0
        %549 = vmatprep.subr.bf16.mxu0 0
        %550 = vmatpush1.bf16.msra.mxu0 0
        %551 = vmatprep.subr.bf16.mxu0 0
        %552 = vmatpush1.bf16.msra.mxu0 0
        %553 = vmatprep.subr.bf16.mxu0 0
        %554 = vmatpush1.bf16.msra.mxu0 0
        %555 = vmatprep.subr.bf16.mxu0 0
        %556 = vmatpush1.bf16.msra.mxu0 0
        %557 = vmatprep.subr.bf16.mxu0 0
        %558 = vmatpush1.bf16.msra.mxu0 %v313
        %559 = vmatprep.subr.bf16.mxu0 0
        %560 = vmatpush2.bf16.msra.mxu0 0
        %561 = vmatprep.subr.bf16.mxu0 0
        %562 = vmatpush2.bf16.msra.mxu0 0
        %563 = vmatprep.subr.bf16.mxu0 0
        %564 = vmatpush2.bf16.msra.mxu0 0
        %565 = vmatprep.subr.bf16.mxu0 0
        %566 = vmatpush2.bf16.msra.mxu0 0
        %567 = vmatprep.subr.bf16.mxu0 0
        %568 = vmatpush2.bf16.msra.mxu0 0
        %569 = vmatprep.subr.bf16.mxu0 0
        %570 = vmatpush2.bf16.msra.mxu0 0
        %571 = vmatprep.subr.bf16.mxu0 0
        %572 = vmatpush2.bf16.msra.mxu0 0
        %573 = vmatprep.subr.bf16.mxu0 0
        %574 = vmatpush2.bf16.msra.mxu0 0
        %575 = vmatprep.mubr.bf16.mxu0 0
        %576 = vmatmul.mubr.bf16.gmra.mxu0 %v541
        %v577 = vpop.f32.mrf.mxu0
        %v578 = vadd.f32 0.0, %v577
        %v579 = vpop.f32.mrf.mxu0
        %v580 = vpop.f32.mrf.mxu0
        %v581 = vpop.f32.mrf.mxu0
        %582 = vdwg.mxu0
        %v583 = vpack.c.bf16 %v578, %v578
        %v588 = vunpack.c.l.b16 %v295
        %v589 = vunpack.c.l.b16 %v296
        %v590 = vunpack.c.l.b16 %v297
        %v591 = vunpack.c.l.b16 %v298
        %v592 = vpack.c.b16 %v589, %v588
        %v593 = vpack.c.b16 %v591, %v590
        %596 = vmatprep.subr.bf16.mxu0 0
        %597 = vmatpush1.bf16.msra.mxu0 0
        %598 = vmatprep.subr.bf16.mxu0 0
        %599 = vmatpush1.bf16.msra.mxu0 0
        %600 = vmatprep.subr.bf16.mxu0 0
        %601 = vmatpush1.bf16.msra.mxu0 0
        %602 = vmatprep.subr.bf16.mxu0 0
        %603 = vmatpush1.bf16.msra.mxu0 0
        %604 = vmatprep.subr.bf16.mxu0 0
        %605 = vmatpush1.bf16.msra.mxu0 0
        %606 = vmatprep.subr.bf16.mxu0 0
        %607 = vmatpush1.bf16.msra.mxu0 0
        %608 = vmatprep.subr.bf16.mxu0 0
        %609 = vmatpush1.bf16.msra.mxu0 %v593
        %610 = vmatprep.subr.bf16.mxu0 0
        %611 = vmatpush1.bf16.msra.mxu0 %v592
        %612 = vmatprep.subr.bf16.mxu0 0
        %613 = vmatpush2.bf16.msra.mxu0 0
        %614 = vmatprep.subr.bf16.mxu0 0
        %615 = vmatpush2.bf16.msra.mxu0 0
        %616 = vmatprep.subr.bf16.mxu0 0
        %617 = vmatpush2.bf16.msra.mxu0 0
        %618 = vmatprep.subr.bf16.mxu0 0
        %619 = vmatpush2.bf16.msra.mxu0 0
        %620 = vmatprep.subr.bf16.mxu0 0
        %621 = vmatpush2.bf16.msra.mxu0 0
        %622 = vmatprep.subr.bf16.mxu0 0
        %623 = vmatpush2.bf16.msra.mxu0 0
        %624 = vmatprep.subr.bf16.mxu0 0
        %625 = vmatpush2.bf16.msra.mxu0 0
        %626 = vmatprep.subr.bf16.mxu0 0
        %627 = vmatpush2.bf16.msra.mxu0 0
        %628 = vmatprep.mubr.bf16.mxu0 0
        %629 = vmatmul.mubr.bf16.gmra.mxu0 %v486
        %v630 = vpop.f32.mrf.mxu0
        %v631 = vadd.f32 0.0, %v630
        %v632 = vpop.f32.mrf.mxu0
        %v633 = vpop.f32.mrf.mxu0
        %v634 = vadd.f32 0.0, %v633
        %v635 = vpop.f32.mrf.mxu0
        %636 = vdwg.mxu0
        %v637 = vpack.c.bf16 %v634, %v631
        %v639 = vsel %vm378, %v637, 0
        %v642 = vsel %vm378, %v583, 0
        %644 = vmatprep.subr.bf16.mxu0 0
        %645 = vmatpush1.bf16.xpose.msra.mxu0 0
        %646 = vmatprep.subr.bf16.mxu0 0
        %647 = vmatpush1.bf16.xpose.msra.mxu0 0
        %648 = vmatprep.subr.bf16.mxu0 0
        %649 = vmatpush1.bf16.xpose.msra.mxu0 0
        %650 = vmatprep.subr.bf16.mxu0 0
        %651 = vmatpush1.bf16.xpose.msra.mxu0 0
        %652 = vmatprep.subr.bf16.mxu0 0
        %653 = vmatpush1.bf16.xpose.msra.mxu0 0
        %654 = vmatprep.subr.bf16.mxu0 0
        %655 = vmatpush1.bf16.xpose.msra.mxu0 0
        %656 = vmatprep.subr.bf16.mxu0 0
        %657 = vmatpush1.bf16.xpose.msra.mxu0 0
        %658 = vmatprep.subr.bf16.mxu0 0
        %659 = vmatpush1.bf16.xpose.msra.mxu0 %v642
        %660 = vmatprep.subr.bf16.mxu0 0
        %661 = vmatpush2.bf16.xpose.msra.mxu0 0
        %662 = vmatprep.subr.bf16.mxu0 0
        %663 = vmatpush2.bf16.xpose.msra.mxu0 0
        %664 = vmatprep.subr.bf16.mxu0 0
        %665 = vmatpush2.bf16.xpose.msra.mxu0 0
        %666 = vmatprep.subr.bf16.mxu0 0
        %667 = vmatpush2.bf16.xpose.msra.mxu0 0
        %668 = vmatprep.subr.bf16.mxu0 0
        %669 = vmatpush2.bf16.xpose.msra.mxu0 0
        %670 = vmatprep.subr.bf16.mxu0 0
        %671 = vmatpush2.bf16.xpose.msra.mxu0 0
        %672 = vmatprep.subr.bf16.mxu0 0
        %673 = vmatpush2.bf16.xpose.msra.mxu0 0
        %674 = vmatprep.subr.bf16.mxu0 0
        %675 = vmatpush2.bf16.xpose.msra.mxu0 0
        %676 = vmatprep.mubr.bf16.mxu0 0
        %677 = vmatmul.mubr.bf16.gmra.mxu0 %v639
        %v678 = vpop.f32.mrf.mxu0
        %v679 = vadd.f32 0.0, %v678
        %v680 = vpop.f32.mrf.mxu0
        %v681 = vpop.f32.mrf.mxu0
        %v682 = vadd.f32 0.0, %v681
        %v683 = vpop.f32.mrf.mxu0
        %684 = vdwg.mxu0
        %vm685 = vcmask 64512
        %v686 = vsel %vm685, %v679, -inf
        %687 = vmax.xlane.f32.xlu0 %v686
        %v688 = vpop.xlane.xlu0 %687
        %v689 = vsel %vm685, %v682, -inf
        %690 = vmax.xlane.f32.xlu0 %v689
        %v691 = vpop.xlane.xlu0 %690
        %v692 = vsub.f32 %v679, %v688
        %v693 = vsub.f32 %v682, %v691
        %v694 = vmul.f32 %v692, 1.442695
        %v695 = vpow.pop %v694
        %v696 = vmul.f32 %v693, 1.442695
        %v697 = vpow.pop %v696
        %v698 = vsel %vm685, %v695, 0.0
        %699 = vadd.xlane.f32.xlu0 %v698
        %v700 = vpop.xlane.xlu0 %699
        %v701 = vsel %vm685, %v697, 0.0
        %702 = vadd.xlane.f32.xlu0 %v701
        %v703 = vpop.xlane.xlu0 %702
        %v704 = vrcp.pop %v700
        %v705 = vrcp.pop %v703
        %v706 = vmul.f32 %v695, %v704
        %v707 = vmul.f32 %v697, %v705
        %v708 = vpack.c.bf16 %v707, %v706
        %v710 = vsel %vm685, %v708, 0
        %vm712 = vcmask 1043456
        %v713 = vsel %vm712, %v583, 0
        %715 = vmatprep.subr.bf16.mxu0 0
        %716 = vmatpush1.bf16.msra.mxu0 0
        %717 = vmatprep.subr.bf16.mxu0 0
        %718 = vmatpush1.bf16.msra.mxu0 0
        %719 = vmatprep.subr.bf16.mxu0 0
        %720 = vmatpush1.bf16.msra.mxu0 0
        %721 = vmatprep.subr.bf16.mxu0 0
        %722 = vmatpush1.bf16.msra.mxu0 0
        %723 = vmatprep.subr.bf16.mxu0 0
        %724 = vmatpush1.bf16.msra.mxu0 0
        %725 = vmatprep.subr.bf16.mxu0 0
        %726 = vmatpush1.bf16.msra.mxu0 0
        %727 = vmatprep.subr.bf16.mxu0 0
        %728 = vmatpush1.bf16.msra.mxu0 0
        %729 = vmatprep.subr.bf16.mxu0 0
        %730 = vmatpush1.bf16.msra.mxu0 %v713
        %731 = vmatprep.subr.bf16.mxu0 0
        %732 = vmatpush2.bf16.msra.mxu0 0
        %733 = vmatprep.subr.bf16.mxu0 0
        %734 = vmatpush2.bf16.msra.mxu0 0
        %735 = vmatprep.subr.bf16.mxu0 0
        %736 = vmatpush2.bf16.msra.mxu0 0
        %737 = vmatprep.subr.bf16.mxu0 0
        %738 = vmatpush2.bf16.msra.mxu0 0
        %739 = vmatprep.subr.bf16.mxu0 0
        %740 = vmatpush2.bf16.msra.mxu0 0
        %741 = vmatprep.subr.bf16.mxu0 0
        %742 = vmatpush2.bf16.msra.mxu0 0
        %743 = vmatprep.subr.bf16.mxu0 0
        %744 = vmatpush2.bf16.msra.mxu0 0
        %745 = vmatprep.subr.bf16.mxu0 0
        %746 = vmatpush2.bf16.msra.mxu0 0
        %747 = vmatprep.mubr.bf16.mxu0 0
        %748 = vmatmul.mubr.bf16.gmra.mxu0 %v710
        %v749 = vpop.f32.mrf.mxu0
        %v750 = vadd.f32 0.0, %v749
        %v751 = vpop.f32.mrf.mxu0
        %v752 = vpop.f32.mrf.mxu0
        %v753 = vadd.f32 0.0, %v752
        %v754 = vpop.f32.mrf.mxu0
        %755 = vdwg.mxu0
        %vm756 = vcmp.gt.f32.partialorder %v750, 0.0
        %vm757 = vcmp.gt.f32.partialorder %v753, 0.0
        %v758 = vmul.f32 %v750, 0.01
        %v759 = vmul.f32 %v753, 0.01
        %v760 = vsel %vm756, %v750, %v758
        %v761 = vsel %vm757, %v753, %v759
        %762 = vst.msk [vmem:[%s272] sm:$0xff] %vm378, %v760
        %763 = vst.msk [vmem:[%s272 + $0x8] sm:$0xff] %vm378, %v761
        %s764 = sand.u32 %s165, 1
        %s765 = scalar_lea.sflag [#allocation4], %s764
        %s766 = sand.u32 %s165, 1
        %s767 = smul.addr %s766, 16
        %s768 = scalar_lea.vmem [#allocation5], %s767
        // Predicated region
        $region49: #{_hgcn_forward_impl.1} parent=43 // pred_check
          %p769 = pneg %p175
        $region50: #{_hgcn_forward_impl.1} parent=43 // pred_check_branch
          %771 = sbr.rel (%p769) target = $region52
        $region51: #{_hgcn_forward_impl.1} parent=43 // pred_region
          %s773 = ssub.s32 256, 256
          %774 = vsyncadd %s765, %s773
          %s775 = smul.addr %s21, 2
          %s776 = smul.addr %s775, 128
          %s777 = scalar_lea.hbm %s6, %s776
          %s778 = sshll.u32 %s768, 4
          %s779 = int_to_ptr.vmem [resolvable:$true] %s778
          %784 = dma.vmem_to_hbm [thread:$0]  %s779, 256, %s777, %s765, 128, 128, 8
        $region52: #{_hgcn_forward_impl.1} parent=43 // pred_fallthru
          _
      $region44: #{_hgcn_forward_impl.1} parent=5 // pred_fallthru
        _
      %p785 = scmp.le.s32.totalorder 2, %s16
      // Predicated region
      $region53: #{_hgcn_forward_impl.1} parent=5 // pred_check
        %p786 = pneg %p785
      $region54: #{_hgcn_forward_impl.1} parent=5 // pred_check_branch
        %788 = sbr.rel (%p786) target = $region56
      $region55: #{_hgcn_forward_impl.1} parent=5 // pred_region
        %s789 = ssub.s32 %s16, 2
        // Predicated region
        $region57: #{_hgcn_forward_impl.1} parent=55 // pred_check
          %p790 = pneg %p181
        $region58: #{_hgcn_forward_impl.1} parent=55 // pred_check_branch
          %792 = sbr.rel (%p790) target = $region60
        $region59: #{_hgcn_forward_impl.1} parent=55 // pred_region
          %s793 = sand.u32 %s166, 1
          %s794 = scalar_lea.sflag [#allocation4], %s793
          %s795 = sand.u32 %s166, 1
          %s796 = smul.addr %s795, 16
          %s797 = scalar_lea.vmem [#allocation5], %s796
          %798 = dma.done %s794, 256
        $region60: #{_hgcn_forward_impl.1} parent=55 // pred_fallthru
          _
      $region56: #{_hgcn_forward_impl.1} parent=5 // pred_fallthru
        _
    $region6: #{_hgcn_forward_impl.1} parent=1 // loop_footer
      %s20 = sadd.s32 1, %s16
    $region7: #{_hgcn_forward_impl.1} parent=1 // loop_footer_branch
      %15 = sbr.rel target = $region3
    $region8: #{_hgcn_forward_impl.1} parent=1 // loop_exit
      _
    %799 = vsyncpa [#allocation3], 1
    %s800 = scalar_lea.sflag [#allocation3], 1
    %801 = vsyncpa %s800, 1
    %802 = vsyncpa [#allocation4], 1
    %s803 = scalar_lea.sflag [#allocation4], 1
    %804 = vsyncpa %s803, 1

</llo_original>
